<compile_context>
chip_gen: v7x
topology: tpu7x:2x2x1
jax: 0.10.0
libtpu: 0.0.40
codegen_flags: <defaults>
</compile_context>

<pallas_src>
import functools

import jax
import jax.numpy as jnp
from jax.experimental import pallas as pl
from jax.experimental.pallas import tpu as pltpu


def _round_up(a, m):
    return (a + m - 1) // m * m


def _pick_tile_m(n_pad):
    # Prefer 512 (better HBM roofline), but keep >= 2 row tiles so the
    # "parallel" axis can shard across v7x's two TensorCores.
    if n_pad % 512 == 0 and n_pad // 512 >= 2:
        return 512
    return min(256, n_pad)


def _pick_tile_k(n_pad):
    # Reduction axis: just take the biggest tile that divides n_pad.
    if n_pad % 512 == 0:
        return 512
    return min(256, n_pad)


def _make_gcn_kernel(h_valid, use_w, feat_resident, tile_k):
    """Build the kernel body.

    use_w=True       -> epilogue does (d_row * acc) @ W + b (bf16 MXU, f32 acc)
    feat_resident    -> feature matrix is a single VMEM-resident block, sliced
                        with pl.ds per source tile inside the kernel.
    """

    def kernel(*refs):
        if use_w:
            adj_ref, feat_ref, drow_ref, w_ref, b_ref, emb_ref, logp_ref, acc_ref = refs
        else:
            adj_ref, feat_ref, drow_ref, b_ref, emb_ref, logp_ref, acc_ref = refs

        k = pl.program_id(1)

        @pl.when(k == 0)
        def _init():
            acc_ref[...] = jnp.zeros_like(acc_ref)

        if feat_resident:
            off = pl.multiple_of(k * tile_k, tile_k)
            feat_blk = feat_ref[pl.ds(off, tile_k), :]
        else:
            feat_blk = feat_ref[...]

        # Aggregate over source-node tiles: acc += (A+I)[i, k] @ feat[k]
        # (bf16 operands, f32 accumulation on the MXU).
        acc_ref[...] += jnp.dot(
            adj_ref[...], feat_blk, preferred_element_type=jnp.float32
        )

        @pl.when(k == pl.num_programs(1) - 1)
        def _finalize():
            # Row-side D^-1/2 applied once, in the epilogue (VPU, f32).
            hacc = acc_ref[...] * drow_ref[...]
            if use_w:
                h = jnp.dot(
                    hacc.astype(jnp.bfloat16),
                    w_ref[...],
                    preferred_element_type=jnp.float32,
                )
            else:
                h = hacc
            h = h + b_ref[...]
            emb_ref[...] = h.astype(emb_ref.dtype)

            # log_softmax over the hidden dim; mask padded lanes so they don't
            # corrupt the max / exp-sum (f32 math throughout).
            lane = jax.lax.broadcasted_iota(jnp.int32, h.shape, 1)
            hm = jnp.where(lane < h_valid, h, -jnp.inf)
            m = jnp.max(hm, axis=1, keepdims=True)
            z = hm - m
            lse = jnp.log(jnp.sum(jnp.exp(z), axis=1, keepdims=True))
            logp_ref[...] = (z - lse).astype(logp_ref.dtype)

    return kernel


@jax.jit
def gnn_forward(x, edge_index, w, b):
    """emb, log_softmax of GCNConv(x, edge_index) = Â @ (X W) + b."""
    n, f = x.shape
    h = w.shape[1]

    n_pad = _round_up(n, 256)
    h_pad = _round_up(h, 128)
    tile_m = _pick_tile_m(n_pad)
    tile_k = _pick_tile_k(n_pad)

    # Add self-loops; unnormalized (A+I) built directly at padded size, cast to
    # bf16 (small integer counts -> exact).
    loop = jnp.arange(n, dtype=edge_index.dtype)
    src = jnp.concatenate([edge_index[0], loop])
    dst = jnp.concatenate([edge_index[1], loop])
    adj_p = (
        jnp.zeros((n_pad, n_pad), jnp.float32).at[dst, src].add(1.0)
    ).astype(jnp.bfloat16)

    # Degrees from the edge list (O(E), no dense pass); deg >= 1 (self-loop).
    deg = jnp.zeros((n,), jnp.float32).at[dst].add(1.0)
    d = jax.lax.rsqrt(deg)
    drow_p = jnp.pad(d, (0, n_pad - n)).reshape(n_pad, 1).astype(jnp.float32)

    # Trace-time branch on *padded* dims (strict '<'): contract the dense N^2
    # matmul through the smaller padded feature width.
    use_w = _round_up(f, 128) < h_pad
    if use_w:
        feat = x * d[:, None]                 # aggregate, then W in epilogue
    else:
        feat = (x @ w) * d[:, None]           # transform-first (tiny O(N f h))
    fd = feat.shape[1]
    fd_pad = _round_up(fd, 128)

    feat_p = jnp.pad(feat, ((0, n_pad - n), (0, fd_pad - fd))).astype(jnp.bfloat16)
    b_p = jnp.pad(b.reshape(1, h), ((0, 0), (0, h_pad - h))).astype(jnp.float32)

    # Keep the whole feature matrix VMEM-resident when it fits (<= 8 MiB, so
    # even a double-buffered copy stays well inside v7x's 64 MiB VMEM).
    feat_resident = n_pad * fd_pad * 2 <= 8 * 1024 * 1024

    grid_i = n_pad // tile_m
    grid_k = n_pad // tile_k

    in_specs = [pl.BlockSpec((tile_m, tile_k), lambda i, k: (i, k))]   # (A+I) tile
    operands = [adj_p]
    if feat_resident:
        in_specs.append(pl.BlockSpec((n_pad, fd_pad), lambda i, k: (0, 0)))
    else:
        in_specs.append(pl.BlockSpec((tile_k, fd_pad), lambda i, k: (k, 0)))
    operands.append(feat_p)
    in_specs.append(pl.BlockSpec((tile_m, 1), lambda i, k: (i, 0)))    # d_row
    operands.append(drow_p)
    if use_w:
        w_p = jnp.pad(w, ((0, fd_pad - f), (0, h_pad - h))).astype(jnp.bfloat16)
        in_specs.append(pl.BlockSpec((fd_pad, h_pad), lambda i, k: (0, 0)))
        operands.append(w_p)
    in_specs.append(pl.BlockSpec((1, h_pad), lambda i, k: (0, 0)))     # bias
    operands.append(b_p)

    out_specs = (
        pl.BlockSpec((tile_m, h_pad), lambda i, k: (i, 0)),            # emb
        pl.BlockSpec((tile_m, h_pad), lambda i, k: (i, 0)),            # log_softmax
    )
    out_shape = (
        jax.ShapeDtypeStruct((n_pad, h_pad), jnp.float32),
        jax.ShapeDtypeStruct((n_pad, h_pad), jnp.float32),
    )

    flops = 2 * n_pad * n_pad * fd_pad + (2 * n_pad * fd_pad * h_pad if use_w else 0)
    feat_bytes = (1 if feat_resident else grid_i) * n_pad * fd_pad * 2
    bytes_accessed = (
        n_pad * n_pad * 2                        # (A+I) bf16 stream (dominant)
        + feat_bytes
        + n_pad * 4                              # d_row
        + (fd_pad * h_pad * 2 if use_w else 0)
        + h_pad * 4
        + 2 * n_pad * h_pad * 4                  # emb + logp writeback
    )
    cost = pl.CostEstimate(
        flops=flops,
        transcendentals=2 * n_pad * h_pad,
        bytes_accessed=bytes_accessed,
    )

    emb_p, logp_p = pl.pallas_call(
        _make_gcn_kernel(h, use_w, feat_resident, tile_k),
        out_shape=out_shape,
        grid_spec=pltpu.PrefetchScalarGridSpec(
            num_scalar_prefetch=0,
            grid=(grid_i, grid_k),
            in_specs=in_specs,
            out_specs=out_specs,
            scratch_shapes=[pltpu.VMEM((tile_m, fd_pad), jnp.float32)],
        ),
        compiler_params=pltpu.CompilerParams(
            dimension_semantics=("parallel", "arbitrary"),
            vmem_limit_bytes=32 * 1024 * 1024,   # safe on v5e/v6e/v7x
        ),
        cost_estimate=cost,
    )(*operands)

    return emb_p[:n, :h], logp_p[:n, :h]


def build_normalized_adjacency(edge_index, num_nodes):
    """Pure-JAX reference: Â = D^-1/2 (A+I) D^-1/2 (PyG GCNConv default norm)."""
    src, dst = edge_index[0], edge_index[1]
    loop = jnp.arange(num_nodes, dtype=edge_index.dtype)
    src = jnp.concatenate([src, loop])
    dst = jnp.concatenate([dst, loop])
    adj = jnp.zeros((num_nodes, num_nodes), jnp.float32).at[dst, src].add(1.0)
    deg = jnp.sum(adj, axis=1)
    deg_inv_sqrt = jnp.where(deg > 0, jax.lax.rsqrt(deg), 0.0)
    return adj * deg_inv_sqrt[:, None] * deg_inv_sqrt[None, :]


class GNNStackPallas:
    """GNNStack(input_dim, hidden_dim, output_dim, task='node') forward."""

    def __init__(self, input_dim, hidden_dim, output_dim, key):
        del output_dim  # post_mp is never called in forward()
        k_w, _ = jax.random.split(key)
        limit = (6.0 / (input_dim + hidden_dim)) ** 0.5
        self.w = jax.random.uniform(
            k_w, (input_dim, hidden_dim), jnp.float32, -limit, limit
        )
        self.b = jnp.zeros((hidden_dim,), jnp.float32)
        # TODO(synk): lns / post_mp / dropout parameters exist in the PyTorch
        # module but are unused in forward() with num_layers=1 and task='node'.

    def __call__(self, x, edge_index):
        return gnn_forward(x, edge_index, self.w, self.b)


if __name__ == "__main__":
    key = jax.random.PRNGKey(0)
    k_x, k_e, k_p = jax.random.split(key, 3)

    num_nodes = 16
    input_dim = 8
    hidden_dim = 32
    output_dim = 4
    num_edges = 40

    x = jax.random.normal(k_x, (num_nodes, input_dim), jnp.float32)
    edge_index = jax.random.randint(
        k_e, (2, num_edges), 0, num_nodes, dtype=jnp.int32
    )

    model = GNNStackPallas(input_dim, hidden_dim, output_dim, k_p)
    emb, logp = model(x, edge_index)
    jax.block_until_ready((emb, logp))

    assert emb.shape == (num_nodes, hidden_dim)
    assert logp.shape == (num_nodes, hidden_dim)

    # Reference check (f32 plain JAX); loose tolerance due to bf16 operands.
    adj_ref = build_normalized_adjacency(edge_index, num_nodes)
    h_ref = adj_ref @ (x @ model.w) + model.b
    logp_ref = jax.nn.log_softmax(h_ref, axis=1)
    assert bool(jnp.max(jnp.abs(emb - h_ref)) < 0.1)
    assert bool(jnp.max(jnp.abs(logp - logp_ref)) < 0.1)
    # log_softmax rows must (exp-)sum to ~1
    row_sums = jnp.sum(jnp.exp(logp), axis=1)
    assert bool(jnp.all(jnp.abs(row_sums - 1.0) < 1e-3))

    print("KERNEL_OK")
</pallas_src>

<mosaic_0001>
module attributes {stable_mosaic.version = 11 : i64} {
  func.func @kernel(%arg0: i32, %arg1: i32, %arg2: memref<256x256xbf16, #tpu.memory_space<vmem>>, %arg3: memref<256x128xbf16, #tpu.memory_space<vmem>>, %arg4: memref<256x1xf32, #tpu.memory_space<vmem>>, %arg5: memref<1x128xf32, #tpu.memory_space<vmem>>, %arg6: memref<256x128xf32, #tpu.memory_space<vmem>>, %arg7: memref<256x128xf32, #tpu.memory_space<vmem>>, %arg8: memref<256x128xf32, #tpu.memory_space<vmem>>) attributes {dimension_semantics = [#tpu.dimension_semantics<parallel>, #tpu.dimension_semantics<arbitrary>], iteration_bounds = array<i64: 1, 1>, scalar_prefetch = 0 : i64, scratch_operands = 1 : i64, tpu.core_type = #tpu.core_type<tc>, window_params = [{transform_indices = @transform_0, window_bounds = array<i64: 256, 256>}, {pipeline_mode = #tpu.pipeline_mode<synchronous>, transform_indices = @transform_1, window_bounds = array<i64: 256, 128>}, {transform_indices = @transform_2, window_bounds = array<i64: 256, 1>}, {pipeline_mode = #tpu.pipeline_mode<synchronous>, transform_indices = @transform_3, window_bounds = array<i64: 1, 128>}, {transform_indices = @transform_4, window_bounds = array<i64: 256, 128>}, {transform_indices = @transform_5, window_bounds = array<i64: 256, 128>}]} {
    %c0_i32 = arith.constant 0 : i32
    %0 = arith.cmpi eq, %arg1, %c0_i32 : i32
    %1 = arith.extui %0 : i1 to i32
    %c0_i32_0 = arith.constant 0 : i32
    %2 = arith.cmpi ne, %1, %c0_i32_0 : i32
    scf.if %2 {
      %cst_9 = arith.constant 0.000000e+00 : f32
      %15 = vector.broadcast %cst_9 : f32 to vector<256x128xf32>
      %c0_10 = arith.constant 0 : index
      %c0_11 = arith.constant 0 : index
      %16 = vector.load %arg8[%c0_10, %c0_11] : memref<256x128xf32, #tpu.memory_space<vmem>>, vector<256x128xf32>
      tpu.vector_store %arg8[%c0_10, %c0_11], %15 {strides = array<i32>} : memref<256x128xf32, #tpu.memory_space<vmem>>, vector<256x128xf32>,
    } else {
    }
    %c256_i32 = arith.constant 256 : i32
    %3 = arith.muli %arg1, %c256_i32 : i32
    %4 = tpu.assume_multiple %3, 256 : i32
    %5 = arith.index_cast %4 : i32 to index
    %c0 = arith.constant 0 : index
    %6 = vector.load %arg3[%5, %c0] : memref<256x128xbf16, #tpu.memory_space<vmem>>, vector<256x128xbf16>
    %c0_1 = arith.constant 0 : index
    %c0_2 = arith.constant 0 : index
    %7 = vector.load %arg8[%c0_1, %c0_2] : memref<256x128xf32, #tpu.memory_space<vmem>>, vector<256x128xf32>
    %c0_3 = arith.constant 0 : index
    %c0_4 = arith.constant 0 : index
    %8 = vector.load %arg2[%c0_3, %c0_4] : memref<256x256xbf16, #tpu.memory_space<vmem>>, vector<256x256xbf16>
    %cst = arith.constant dense<0.000000e+00> : vector<256x128xf32>
    %9 = tpu.matmul %8, %6, %cst {dimension_numbers = #tpu.dot_dimension_numbers<[1], [0], [0], [1], [0, 0, 1, 1], [], []>} : vector<256x256xbf16>, vector<256x128xbf16>, vector<256x128xf32> -> vector<256x128xf32>
    %10 = arith.addf %7, %9 : vector<256x128xf32>
    %c0_5 = arith.constant 0 : index
    %c0_6 = arith.constant 0 : index
    %11 = vector.load %arg8[%c0_5, %c0_6] : memref<256x128xf32, #tpu.memory_space<vmem>>, vector<256x128xf32>
    tpu.vector_store %arg8[%c0_5, %c0_6], %10 {strides = array<i32>} : memref<256x128xf32, #tpu.memory_space<vmem>>, vector<256x128xf32>,
    %c0_i32_7 = arith.constant 0 : i32
    %12 = arith.cmpi eq, %arg1, %c0_i32_7 : i32
    %13 = arith.extui %12 : i1 to i32
    %c0_i32_8 = arith.constant 0 : i32
    %14 = arith.cmpi ne, %13, %c0_i32_8 : i32
    scf.if %14 {
      %c0_9 = arith.constant 0 : index
      %c0_10 = arith.constant 0 : index
      %15 = vector.load %arg8[%c0_9, %c0_10] : memref<256x128xf32, #tpu.memory_space<vmem>>, vector<256x128xf32>
      %c0_11 = arith.constant 0 : index
      %c0_12 = arith.constant 0 : index
      %16 = vector.load %arg4[%c0_11, %c0_12] : memref<256x1xf32, #tpu.memory_space<vmem>>, vector<256x1xf32>
      %17 = vector.broadcast %16 : vector<256x1xf32> to vector<256x128xf32>
      %18 = arith.mulf %15, %17 : vector<256x128xf32>
      %c0_13 = arith.constant 0 : index
      %c0_14 = arith.constant 0 : index
      %19 = vector.load %arg5[%c0_13, %c0_14] : memref<1x128xf32, #tpu.memory_space<vmem>>, vector<1x128xf32>
      %20 = vector.broadcast %19 : vector<1x128xf32> to vector<256x128xf32>
      %21 = arith.addf %18, %20 : vector<256x128xf32>
      %c0_15 = arith.constant 0 : index
      %c0_16 = arith.constant 0 : index
      %22 = vector.load %arg6[%c0_15, %c0_16] : memref<256x128xf32, #tpu.memory_space<vmem>>, vector<256x128xf32>
      tpu.vector_store %arg6[%c0_15, %c0_16], %21 {strides = array<i32>} : memref<256x128xf32, #tpu.memory_space<vmem>>, vector<256x128xf32>,
      %23 = tpu.iota {dimensions = array<i32: 1>} : vector<256x128xi32>
      %c32_i32 = arith.constant 32 : i32
      %24 = vector.broadcast %c32_i32 : i32 to vector<256x128xi32>
      %25 = arith.cmpi slt, %23, %24 : vector<256x128xi32>
      %cst_17 = arith.constant 0xFF800000 : f32
      %26 = vector.broadcast %cst_17 : f32 to vector<256x128xf32>
      %27 = arith.select %25, %21, %26 : vector<256x128xi1>, vector<256x128xf32>
      %cst_18 = arith.constant dense<0xFF800000> : vector<256xf32>
      %28 = vector.multi_reduction <maximumf>, %27, %cst_18 [1] : vector<256x128xf32> to vector<256xf32>
      %29 = vector.shape_cast %28 : vector<256xf32> to vector<256x1xf32>
      %30 = vector.broadcast %29 : vector<256x1xf32> to vector<256x128xf32>
      %31 = arith.subf %27, %30 : vector<256x128xf32>
      %32 = math.exp %31 : vector<256x128xf32>
      %cst_19 = arith.constant dense<0.000000e+00> : vector<256xf32>
      %33 = vector.multi_reduction <add>, %32, %cst_19 [1] : vector<256x128xf32> to vector<256xf32>
      %34 = vector.shape_cast %33 : vector<256xf32> to vector<256x1xf32>
      %35 = math.log %34 : vector<256x1xf32>
      %36 = vector.broadcast %35 : vector<256x1xf32> to vector<256x128xf32>
      %37 = arith.subf %31, %36 : vector<256x128xf32>
      %c0_20 = arith.constant 0 : index
      %c0_21 = arith.constant 0 : index
      %38 = vector.load %arg7[%c0_20, %c0_21] : memref<256x128xf32, #tpu.memory_space<vmem>>, vector<256x128xf32>
      tpu.vector_store %arg7[%c0_20, %c0_21], %37 {strides = array<i32>} : memref<256x128xf32, #tpu.memory_space<vmem>>, vector<256x128xf32>,
    } else {
    }
    return
  }
  func.func @transform_0(%arg0: i32, %arg1: i32) -> (i32, i32) {
    %c0_i32 = arith.constant 0 : i32
    return %arg0, %arg1 : i32, i32
  }
  func.func @transform_1(%arg0: i32, %arg1: i32) -> (i32, i32) {
    %c0_i32 = arith.constant 0 : i32
    %c0_i32_0 = arith.constant 0 : i32
    %c0_i32_1 = arith.constant 0 : i32
    return %c0_i32, %c0_i32_0 : i32, i32
  }
  func.func @transform_2(%arg0: i32, %arg1: i32) -> (i32, i32) {
    %c0_i32 = arith.constant 0 : i32
    %c0_i32_0 = arith.constant 0 : i32
    return %arg0, %c0_i32 : i32, i32
  }
  func.func @transform_3(%arg0: i32, %arg1: i32) -> (i32, i32) {
    %c0_i32 = arith.constant 0 : i32
    %c0_i32_0 = arith.constant 0 : i32
    %c0_i32_1 = arith.constant 0 : i32
    return %c0_i32, %c0_i32_0 : i32, i32
  }
  func.func @transform_4(%arg0: i32, %arg1: i32) -> (i32, i32) {
    %c0_i32 = arith.constant 0 : i32
    %c0_i32_0 = arith.constant 0 : i32
    return %arg0, %c0_i32 : i32, i32
  }
  func.func @transform_5(%arg0: i32, %arg1: i32) -> (i32, i32) {
    %c0_i32 = arith.constant 0 : i32
    %c0_i32_0 = arith.constant 0 : i32
    return %arg0, %c0_i32 : i32, i32
  }
}

</mosaic_0001>

<llo_original>
// kernel: gnn_forward.1
$region0: #{gnn_forward.1}
  #allocation0 [shape = 'u32[]', space=smem, size = 0x4, offset = 0x4, fixed_abs, tag = 'smem constant byte address 0x4 - core index']
  #allocation1 [shape = 'u32[144,128]{1,0:T(1,128)}', space=vmem, size = 0x12000, scoped, tag = 'internal scratch']
  #allocation2 [shape = 'f32[256,128]{1,0:T(8,128)}', space=vmem, size = 0x20000, scoped, tag = 'scratch operand']
  %s0 = inlined_call_operand.vmem [shape: bf16[256,256], index: 0, kind: input, shape index: {}]
  %s1 = inlined_call_operand.vmem [shape: bf16[256,128], index: 1, kind: input, shape index: {}]
  %s2 = inlined_call_operand.vmem [shape: f32[256,1], index: 2, kind: input, shape index: {}]
  %s3 = inlined_call_operand.vmem [shape: f32[1,128], index: 3, kind: input, shape index: {}]
  %s4 = inlined_call_operand.vmem [shape: f32[256,128], index: 4, kind: output, shape index: {0}]
  %s5 = inlined_call_operand.vmem [shape: f32[256,128], index: 5, kind: output, shape index: {1}]
  %6 = xla_tuple %s4, %s5
  %s7 = sld [smem:[#allocation0]]
  $region42: #{gnn_forward.1} parent=0
    _
  %s9 = ssub.s32 1, %s7
  %s10 = scalar_select 0, %s9, %s7
  // Predicated region
  $region2: #{gnn_forward.1} parent=0 // pred_check
    _
  $region3: #{gnn_forward.1} parent=0 // pred_check_branch
    %12 = sbr.rel (0) target = $region5
  $region4: #{gnn_forward.1} parent=0 // pred_region
    _
  $region5: #{gnn_forward.1} parent=0 // pred_fallthru
    _
  // Predicated region
  $region6: #{gnn_forward.1} parent=0 // pred_check
    _
  $region7: #{gnn_forward.1} parent=0 // pred_check_branch
    %14 = sbr.rel (0) target = $region9
  $region8: #{gnn_forward.1} parent=0 // pred_region
    _
  $region9: #{gnn_forward.1} parent=0 // pred_fallthru
    _
  // Predicated region
  $region10: #{gnn_forward.1} parent=0 // pred_check
    _
  $region11: #{gnn_forward.1} parent=0 // pred_check_branch
    %16 = sbr.rel (0) target = $region13
  $region12: #{gnn_forward.1} parent=0 // pred_region
    _
  $region13: #{gnn_forward.1} parent=0 // pred_fallthru
    _
  // Predicated region
  $region14: #{gnn_forward.1} parent=0 // pred_check
    _
  $region15: #{gnn_forward.1} parent=0 // pred_check_branch
    %18 = sbr.rel (0) target = $region17
  $region16: #{gnn_forward.1} parent=0 // pred_region
    _
  $region17: #{gnn_forward.1} parent=0 // pred_fallthru
    _
  %p20 = scmp.eq.s32.totalorder 0, 0
  // Predicated region
  $region18: #{gnn_forward.1} parent=0 // pred_check
    %p21 = pneg %p20
  $region19: #{gnn_forward.1} parent=0 // pred_check_branch
    %23 = sbr.rel (%p21) target = $region21
  $region20: #{gnn_forward.1} parent=0 // pred_region
    %24 = vst [vmem:[#allocation2] sm:$0xff] 0.0
    %25 = vst [vmem:[#allocation2 + $0x8] sm:$0xff] 0.0
    %26 = vst [vmem:[#allocation2 + $0x10] sm:$0xff] 0.0
    %27 = vst [vmem:[#allocation2 + $0x18] sm:$0xff] 0.0
    %28 = vst [vmem:[#allocation2 + $0x20] sm:$0xff] 0.0
    %29 = vst [vmem:[#allocation2 + $0x28] sm:$0xff] 0.0
    %30 = vst [vmem:[#allocation2 + $0x30] sm:$0xff] 0.0
    %31 = vst [vmem:[#allocation2 + $0x38] sm:$0xff] 0.0
    %32 = vst [vmem:[#allocation2 + $0x40] sm:$0xff] 0.0
    %33 = vst [vmem:[#allocation2 + $0x48] sm:$0xff] 0.0
    %34 = vst [vmem:[#allocation2 + $0x50] sm:$0xff] 0.0
    %35 = vst [vmem:[#allocation2 + $0x58] sm:$0xff] 0.0
    %36 = vst [vmem:[#allocation2 + $0x60] sm:$0xff] 0.0
    %37 = vst [vmem:[#allocation2 + $0x68] sm:$0xff] 0.0
    %38 = vst [vmem:[#allocation2 + $0x70] sm:$0xff] 0.0
    %39 = vst [vmem:[#allocation2 + $0x78] sm:$0xff] 0.0
    %40 = vst [vmem:[#allocation2 + $0x80] sm:$0xff] 0.0
    %41 = vst [vmem:[#allocation2 + $0x88] sm:$0xff] 0.0
    %42 = vst [vmem:[#allocation2 + $0x90] sm:$0xff] 0.0
    %43 = vst [vmem:[#allocation2 + $0x98] sm:$0xff] 0.0
    %44 = vst [vmem:[#allocation2 + $0xa0] sm:$0xff] 0.0
    %45 = vst [vmem:[#allocation2 + $0xa8] sm:$0xff] 0.0
    %46 = vst [vmem:[#allocation2 + $0xb0] sm:$0xff] 0.0
    %47 = vst [vmem:[#allocation2 + $0xb8] sm:$0xff] 0.0
    %48 = vst [vmem:[#allocation2 + $0xc0] sm:$0xff] 0.0
    %49 = vst [vmem:[#allocation2 + $0xc8] sm:$0xff] 0.0
    %50 = vst [vmem:[#allocation2 + $0xd0] sm:$0xff] 0.0
    %51 = vst [vmem:[#allocation2 + $0xd8] sm:$0xff] 0.0
    %52 = vst [vmem:[#allocation2 + $0xe0] sm:$0xff] 0.0
    %53 = vst [vmem:[#allocation2 + $0xe8] sm:$0xff] 0.0
    %54 = vst [vmem:[#allocation2 + $0xf0] sm:$0xff] 0.0
    %55 = vst [vmem:[#allocation2 + $0xf8] sm:$0xff] 0.0
  $region21: #{gnn_forward.1} parent=0 // pred_fallthru
    _
  %s56 = smul.u32 0, 256
  %s57 = sshra.s32 %s56, 3
  %s58 = sand.u32 %s56, 7
  %s59 = smul.addr %s57, 4
  %s60 = scalar_lea.vmem %s1, %s59
  %v61 = vld [vmem:[%s60] sm:$0xf]
  %v62 = vld [vmem:[%s60 + $0x4] sm:$0xf]
  %v63 = vld [vmem:[%s60 + $0x8] sm:$0xf]
  %v64 = vld [vmem:[%s60 + $0xc] sm:$0xf]
  %v65 = vld [vmem:[%s60 + $0x10] sm:$0xf]
  %v66 = vld [vmem:[%s60 + $0x14] sm:$0xf]
  %v67 = vld [vmem:[%s60 + $0x18] sm:$0xf]
  %v68 = vld [vmem:[%s60 + $0x1c] sm:$0xf]
  %v69 = vld [vmem:[%s60 + $0x20] sm:$0xf]
  %v70 = vld [vmem:[%s60 + $0x24] sm:$0xf]
  %v71 = vld [vmem:[%s60 + $0x28] sm:$0xf]
  %v72 = vld [vmem:[%s60 + $0x2c] sm:$0xf]
  %v73 = vld [vmem:[%s60 + $0x30] sm:$0xf]
  %v74 = vld [vmem:[%s60 + $0x34] sm:$0xf]
  %v75 = vld [vmem:[%s60 + $0x38] sm:$0xf]
  %v76 = vld [vmem:[%s60 + $0x3c] sm:$0xf]
  %v77 = vld [vmem:[%s60 + $0x40] sm:$0xf]
  %v78 = vld [vmem:[%s60 + $0x44] sm:$0xf]
  %v79 = vld [vmem:[%s60 + $0x48] sm:$0xf]
  %v80 = vld [vmem:[%s60 + $0x4c] sm:$0xf]
  %v81 = vld [vmem:[%s60 + $0x50] sm:$0xf]
  %v82 = vld [vmem:[%s60 + $0x54] sm:$0xf]
  %v83 = vld [vmem:[%s60 + $0x58] sm:$0xf]
  %v84 = vld [vmem:[%s60 + $0x5c] sm:$0xf]
  %v85 = vld [vmem:[%s60 + $0x60] sm:$0xf]
  %v86 = vld [vmem:[%s60 + $0x64] sm:$0xf]
  %v87 = vld [vmem:[%s60 + $0x68] sm:$0xf]
  %v88 = vld [vmem:[%s60 + $0x6c] sm:$0xf]
  %v89 = vld [vmem:[%s60 + $0x70] sm:$0xf]
  %v90 = vld [vmem:[%s60 + $0x74] sm:$0xf]
  %v91 = vld [vmem:[%s60 + $0x78] sm:$0xf]
  %v92 = vld [vmem:[%s60 + $0x7c] sm:$0xf]
  %v93 = vld [vmem:[#allocation2] sm:$0xff]
  %v94 = vld [vmem:[#allocation2 + $0x8] sm:$0xff]
  %v95 = vld [vmem:[#allocation2 + $0x10] sm:$0xff]
  %v96 = vld [vmem:[#allocation2 + $0x18] sm:$0xff]
  %v97 = vld [vmem:[#allocation2 + $0x20] sm:$0xff]
  %v98 = vld [vmem:[#allocation2 + $0x28] sm:$0xff]
  %v99 = vld [vmem:[#allocation2 + $0x30] sm:$0xff]
  %v100 = vld [vmem:[#allocation2 + $0x38] sm:$0xff]
  %v101 = vld [vmem:[#allocation2 + $0x40] sm:$0xff]
  %v102 = vld [vmem:[#allocation2 + $0x48] sm:$0xff]
  %v103 = vld [vmem:[#allocation2 + $0x50] sm:$0xff]
  %v104 = vld [vmem:[#allocation2 + $0x58] sm:$0xff]
  %v105 = vld [vmem:[#allocation2 + $0x60] sm:$0xff]
  %v106 = vld [vmem:[#allocation2 + $0x68] sm:$0xff]
  %v107 = vld [vmem:[#allocation2 + $0x70] sm:$0xff]
  %v108 = vld [vmem:[#allocation2 + $0x78] sm:$0xff]
  %v109 = vld [vmem:[#allocation2 + $0x80] sm:$0xff]
  %v110 = vld [vmem:[#allocation2 + $0x88] sm:$0xff]
  %v111 = vld [vmem:[#allocation2 + $0x90] sm:$0xff]
  %v112 = vld [vmem:[#allocation2 + $0x98] sm:$0xff]
  %v113 = vld [vmem:[#allocation2 + $0xa0] sm:$0xff]
  %v114 = vld [vmem:[#allocation2 + $0xa8] sm:$0xff]
  %v115 = vld [vmem:[#allocation2 + $0xb0] sm:$0xff]
  %v116 = vld [vmem:[#allocation2 + $0xb8] sm:$0xff]
  %v117 = vld [vmem:[#allocation2 + $0xc0] sm:$0xff]
  %v118 = vld [vmem:[#allocation2 + $0xc8] sm:$0xff]
  %v119 = vld [vmem:[#allocation2 + $0xd0] sm:$0xff]
  %v120 = vld [vmem:[#allocation2 + $0xd8] sm:$0xff]
  %v121 = vld [vmem:[#allocation2 + $0xe0] sm:$0xff]
  %v122 = vld [vmem:[#allocation2 + $0xe8] sm:$0xff]
  %v123 = vld [vmem:[#allocation2 + $0xf0] sm:$0xff]
  %v124 = vld [vmem:[#allocation2 + $0xf8] sm:$0xff]
  %v125 = vld [vmem:[%s0] sm:$0xff]
  %v126 = vld [vmem:[%s0 + $0x8] sm:$0xff]
  %v127 = vld [vmem:[%s0 + $0x10] sm:$0xff]
  %v128 = vld [vmem:[%s0 + $0x18] sm:$0xff]
  %v129 = vld [vmem:[%s0 + $0x20] sm:$0xff]
  %v130 = vld [vmem:[%s0 + $0x28] sm:$0xff]
  %v131 = vld [vmem:[%s0 + $0x30] sm:$0xff]
  %v132 = vld [vmem:[%s0 + $0x38] sm:$0xff]
  %v133 = vld [vmem:[%s0 + $0x40] sm:$0xff]
  %v134 = vld [vmem:[%s0 + $0x48] sm:$0xff]
  %v135 = vld [vmem:[%s0 + $0x50] sm:$0xff]
  %v136 = vld [vmem:[%s0 + $0x58] sm:$0xff]
  %v137 = vld [vmem:[%s0 + $0x60] sm:$0xff]
  %v138 = vld [vmem:[%s0 + $0x68] sm:$0xff]
  %v139 = vld [vmem:[%s0 + $0x70] sm:$0xff]
  %v140 = vld [vmem:[%s0 + $0x78] sm:$0xff]
  %v141 = vld [vmem:[%s0 + $0x80] sm:$0xff]
  %v142 = vld [vmem:[%s0 + $0x88] sm:$0xff]
  %v143 = vld [vmem:[%s0 + $0x90] sm:$0xff]
  %v144 = vld [vmem:[%s0 + $0x98] sm:$0xff]
  %v145 = vld [vmem:[%s0 + $0xa0] sm:$0xff]
  %v146 = vld [vmem:[%s0 + $0xa8] sm:$0xff]
  %v147 = vld [vmem:[%s0 + $0xb0] sm:$0xff]
  %v148 = vld [vmem:[%s0 + $0xb8] sm:$0xff]
  %v149 = vld [vmem:[%s0 + $0xc0] sm:$0xff]
  %v150 = vld [vmem:[%s0 + $0xc8] sm:$0xff]
  %v151 = vld [vmem:[%s0 + $0xd0] sm:$0xff]
  %v152 = vld [vmem:[%s0 + $0xd8] sm:$0xff]
  %v153 = vld [vmem:[%s0 + $0xe0] sm:$0xff]
  %v154 = vld [vmem:[%s0 + $0xe8] sm:$0xff]
  %v155 = vld [vmem:[%s0 + $0xf0] sm:$0xff]
  %v156 = vld [vmem:[%s0 + $0xf8] sm:$0xff]
  %v189 = vunpack.c.l.b16 %v125
  %v190 = vunpack.c.h.b16 %v125
  %v191 = vunpack.c.l.b16 %v126
  %v192 = vunpack.c.h.b16 %v126
  %v193 = vunpack.c.l.b16 %v127
  %v194 = vunpack.c.h.b16 %v127
  %v195 = vunpack.c.l.b16 %v128
  %v196 = vunpack.c.h.b16 %v128
  %v197 = vunpack.c.l.b16 %v129
  %v198 = vunpack.c.h.b16 %v129
  %v199 = vunpack.c.l.b16 %v130
  %v200 = vunpack.c.h.b16 %v130
  %v201 = vunpack.c.l.b16 %v131
  %v202 = vunpack.c.h.b16 %v131
  %v203 = vunpack.c.l.b16 %v132
  %v204 = vunpack.c.h.b16 %v132
  %v205 = vunpack.c.l.b16 %v133
  %v206 = vunpack.c.h.b16 %v133
  %v207 = vunpack.c.l.b16 %v134
  %v208 = vunpack.c.h.b16 %v134
  %v209 = vunpack.c.l.b16 %v135
  %v210 = vunpack.c.h.b16 %v135
  %v211 = vunpack.c.l.b16 %v136
  %v212 = vunpack.c.h.b16 %v136
  %v213 = vunpack.c.l.b16 %v137
  %v214 = vunpack.c.h.b16 %v137
  %v215 = vunpack.c.l.b16 %v138
  %v216 = vunpack.c.h.b16 %v138
  %v217 = vunpack.c.l.b16 %v139
  %v218 = vunpack.c.h.b16 %v139
  %v219 = vunpack.c.l.b16 %v140
  %v220 = vunpack.c.h.b16 %v140
  %v221 = vunpack.c.l.b16 %v141
  %v222 = vunpack.c.h.b16 %v141
  %v223 = vunpack.c.l.b16 %v142
  %v224 = vunpack.c.h.b16 %v142
  %v225 = vunpack.c.l.b16 %v143
  %v226 = vunpack.c.h.b16 %v143
  %v227 = vunpack.c.l.b16 %v144
  %v228 = vunpack.c.h.b16 %v144
  %v229 = vunpack.c.l.b16 %v145
  %v230 = vunpack.c.h.b16 %v145
  %v231 = vunpack.c.l.b16 %v146
  %v232 = vunpack.c.h.b16 %v146
  %v233 = vunpack.c.l.b16 %v147
  %v234 = vunpack.c.h.b16 %v147
  %v235 = vunpack.c.l.b16 %v148
  %v236 = vunpack.c.h.b16 %v148
  %v237 = vunpack.c.l.b16 %v149
  %v238 = vunpack.c.h.b16 %v149
  %v239 = vunpack.c.l.b16 %v150
  %v240 = vunpack.c.h.b16 %v150
  %v241 = vunpack.c.l.b16 %v151
  %v242 = vunpack.c.h.b16 %v151
  %v243 = vunpack.c.l.b16 %v152
  %v244 = vunpack.c.h.b16 %v152
  %v245 = vunpack.c.l.b16 %v153
  %v246 = vunpack.c.h.b16 %v153
  %v247 = vunpack.c.l.b16 %v154
  %v248 = vunpack.c.h.b16 %v154
  %v249 = vunpack.c.l.b16 %v155
  %v250 = vunpack.c.h.b16 %v155
  %v251 = vunpack.c.l.b16 %v156
  %v252 = vunpack.c.h.b16 %v156
  %v253 = vpack.c.b16 %v191, %v189
  %v254 = vpack.c.b16 %v192, %v190
  %v255 = vpack.c.b16 %v195, %v193
  %v256 = vpack.c.b16 %v196, %v194
  %v257 = vpack.c.b16 %v199, %v197
  %v258 = vpack.c.b16 %v200, %v198
  %v259 = vpack.c.b16 %v203, %v201
  %v260 = vpack.c.b16 %v204, %v202
  %v261 = vpack.c.b16 %v207, %v205
  %v262 = vpack.c.b16 %v208, %v206
  %v263 = vpack.c.b16 %v211, %v209
  %v264 = vpack.c.b16 %v212, %v210
  %v265 = vpack.c.b16 %v215, %v213
  %v266 = vpack.c.b16 %v216, %v214
  %v267 = vpack.c.b16 %v219, %v217
  %v268 = vpack.c.b16 %v220, %v218
  %v269 = vpack.c.b16 %v223, %v221
  %v270 = vpack.c.b16 %v224, %v222
  %v271 = vpack.c.b16 %v227, %v225
  %v272 = vpack.c.b16 %v228, %v226
  %v273 = vpack.c.b16 %v231, %v229
  %v274 = vpack.c.b16 %v232, %v230
  %v275 = vpack.c.b16 %v235, %v233
  %v276 = vpack.c.b16 %v236, %v234
  %v277 = vpack.c.b16 %v239, %v237
  %v278 = vpack.c.b16 %v240, %v238
  %v279 = vpack.c.b16 %v243, %v241
  %v280 = vpack.c.b16 %v244, %v242
  %v281 = vpack.c.b16 %v247, %v245
  %v282 = vpack.c.b16 %v248, %v246
  %v283 = vpack.c.b16 %v251, %v249
  %v284 = vpack.c.b16 %v252, %v250
  %v349 = vunpack.c.l.b16 %v61
  %v350 = vunpack.c.l.b16 %v62
  %v351 = vunpack.c.l.b16 %v63
  %v352 = vunpack.c.l.b16 %v64
  %v353 = vunpack.c.l.b16 %v65
  %v354 = vunpack.c.l.b16 %v66
  %v355 = vunpack.c.l.b16 %v67
  %v356 = vunpack.c.l.b16 %v68
  %v357 = vunpack.c.l.b16 %v69
  %v358 = vunpack.c.l.b16 %v70
  %v359 = vunpack.c.l.b16 %v71
  %v360 = vunpack.c.l.b16 %v72
  %v361 = vunpack.c.l.b16 %v73
  %v362 = vunpack.c.l.b16 %v74
  %v363 = vunpack.c.l.b16 %v75
  %v364 = vunpack.c.l.b16 %v76
  %v365 = vunpack.c.l.b16 %v77
  %v366 = vunpack.c.l.b16 %v78
  %v367 = vunpack.c.l.b16 %v79
  %v368 = vunpack.c.l.b16 %v80
  %v369 = vunpack.c.l.b16 %v81
  %v370 = vunpack.c.l.b16 %v82
  %v371 = vunpack.c.l.b16 %v83
  %v372 = vunpack.c.l.b16 %v84
  %v373 = vunpack.c.l.b16 %v85
  %v374 = vunpack.c.l.b16 %v86
  %v375 = vunpack.c.l.b16 %v87
  %v376 = vunpack.c.l.b16 %v88
  %v377 = vunpack.c.l.b16 %v89
  %v378 = vunpack.c.l.b16 %v90
  %v379 = vunpack.c.l.b16 %v91
  %v380 = vunpack.c.l.b16 %v92
  %v381 = vpack.c.b16 %v350, %v349
  %v382 = vpack.c.b16 %v352, %v351
  %v383 = vpack.c.b16 %v354, %v353
  %v384 = vpack.c.b16 %v356, %v355
  %v385 = vpack.c.b16 %v358, %v357
  %v386 = vpack.c.b16 %v360, %v359
  %v387 = vpack.c.b16 %v362, %v361
  %v388 = vpack.c.b16 %v364, %v363
  %v389 = vpack.c.b16 %v366, %v365
  %v390 = vpack.c.b16 %v368, %v367
  %v391 = vpack.c.b16 %v370, %v369
  %v392 = vpack.c.b16 %v372, %v371
  %v393 = vpack.c.b16 %v374, %v373
  %v394 = vpack.c.b16 %v376, %v375
  %v395 = vpack.c.b16 %v378, %v377
  %v396 = vpack.c.b16 %v380, %v379
  %413 = vmatprep.subr.bf16.mxu0 0
  %414 = vmatpush1.bf16.msra.mxu0 %v381
  %415 = vmatprep.subr.bf16.mxu0 0
  %416 = vmatpush1.bf16.msra.mxu0 %v382
  %417 = vmatprep.subr.bf16.mxu0 0
  %418 = vmatpush1.bf16.msra.mxu0 %v383
  %419 = vmatprep.subr.bf16.mxu0 0
  %420 = vmatpush1.bf16.msra.mxu0 %v384
  %421 = vmatprep.subr.bf16.mxu0 0
  %422 = vmatpush1.bf16.msra.mxu0 %v385
  %423 = vmatprep.subr.bf16.mxu0 0
  %424 = vmatpush1.bf16.msra.mxu0 %v386
  %425 = vmatprep.subr.bf16.mxu0 0
  %426 = vmatpush1.bf16.msra.mxu0 %v387
  %427 = vmatprep.subr.bf16.mxu0 0
  %428 = vmatpush1.bf16.msra.mxu0 %v388
  %429 = vmatprep.subr.bf16.mxu0 0
  %430 = vmatpush1.bf16.msra.mxu0 %v389
  %431 = vmatprep.subr.bf16.mxu0 0
  %432 = vmatpush1.bf16.msra.mxu0 %v390
  %433 = vmatprep.subr.bf16.mxu0 0
  %434 = vmatpush1.bf16.msra.mxu0 %v391
  %435 = vmatprep.subr.bf16.mxu0 0
  %436 = vmatpush1.bf16.msra.mxu0 %v392
  %437 = vmatprep.subr.bf16.mxu0 0
  %438 = vmatpush1.bf16.msra.mxu0 %v393
  %439 = vmatprep.subr.bf16.mxu0 0
  %440 = vmatpush1.bf16.msra.mxu0 %v394
  %441 = vmatprep.subr.bf16.mxu0 0
  %442 = vmatpush1.bf16.msra.mxu0 %v395
  %443 = vmatprep.subr.bf16.mxu0 0
  %444 = vmatpush1.bf16.msra.mxu0 %v396
  %445 = vmatprep.mubr.bf16.mxu0 %v254
  %446 = vmatmul.mubr.bf16.gmra.mrb[0].mxu0 %v253
  %v447 = vpop.f32.mrb[0].mxu0
  %v448 = vadd.f32 0.0, %v447
  %v449 = vpop.f32.mrb[0].mxu0
  %v450 = vpop.f32.mrb[0].mxu0
  %v451 = vadd.f32 0.0, %v450
  %v452 = vpop.f32.mrb[0].mxu0
  %453 = vmatprep.mubr.bf16.mxu0 %v256
  %454 = vmatmul.mubr.bf16.gmra.mrb[0].mxu0 %v255
  %v455 = vpop.f32.mrb[0].mxu0
  %v456 = vadd.f32 0.0, %v455
  %v457 = vpop.f32.mrb[0].mxu0
  %v458 = vpop.f32.mrb[0].mxu0
  %v459 = vadd.f32 0.0, %v458
  %v460 = vpop.f32.mrb[0].mxu0
  %461 = vmatprep.mubr.bf16.mxu0 %v258
  %462 = vmatmul.mubr.bf16.gmra.mrb[0].mxu0 %v257
  %v463 = vpop.f32.mrb[0].mxu0
  %v464 = vadd.f32 0.0, %v463
  %v465 = vpop.f32.mrb[0].mxu0
  %v466 = vpop.f32.mrb[0].mxu0
  %v467 = vadd.f32 0.0, %v466
  %v468 = vpop.f32.mrb[0].mxu0
  %469 = vmatprep.mubr.bf16.mxu0 %v260
  %470 = vmatmul.mubr.bf16.gmra.mrb[0].mxu0 %v259
  %v471 = vpop.f32.mrb[0].mxu0
  %v472 = vadd.f32 0.0, %v471
  %v473 = vpop.f32.mrb[0].mxu0
  %v474 = vpop.f32.mrb[0].mxu0
  %v475 = vadd.f32 0.0, %v474
  %v476 = vpop.f32.mrb[0].mxu0
  %477 = vmatprep.mubr.bf16.mxu0 %v262
  %478 = vmatmul.mubr.bf16.gmra.mrb[0].mxu0 %v261
  %v479 = vpop.f32.mrb[0].mxu0
  %v480 = vadd.f32 0.0, %v479
  %v481 = vpop.f32.mrb[0].mxu0
  %v482 = vpop.f32.mrb[0].mxu0
  %v483 = vadd.f32 0.0, %v482
  %v484 = vpop.f32.mrb[0].mxu0
  %485 = vmatprep.mubr.bf16.mxu0 %v264
  %486 = vmatmul.mubr.bf16.gmra.mrb[0].mxu0 %v263
  %v487 = vpop.f32.mrb[0].mxu0
  %v488 = vadd.f32 0.0, %v487
  %v489 = vpop.f32.mrb[0].mxu0
  %v490 = vpop.f32.mrb[0].mxu0
  %v491 = vadd.f32 0.0, %v490
  %v492 = vpop.f32.mrb[0].mxu0
  %493 = vmatprep.mubr.bf16.mxu0 %v266
  %494 = vmatmul.mubr.bf16.gmra.mrb[0].mxu0 %v265
  %v495 = vpop.f32.mrb[0].mxu0
  %v496 = vadd.f32 0.0, %v495
  %v497 = vpop.f32.mrb[0].mxu0
  %v498 = vpop.f32.mrb[0].mxu0
  %v499 = vadd.f32 0.0, %v498
  %v500 = vpop.f32.mrb[0].mxu0
  %501 = vmatprep.mubr.bf16.mxu0 %v268
  %502 = vmatmul.mubr.bf16.gmra.mrb[0].mxu0 %v267
  %v503 = vpop.f32.mrb[0].mxu0
  %v504 = vadd.f32 0.0, %v503
  %v505 = vpop.f32.mrb[0].mxu0
  %v506 = vpop.f32.mrb[0].mxu0
  %v507 = vadd.f32 0.0, %v506
  %v508 = vpop.f32.mrb[0].mxu0
  %509 = vmatprep.mubr.bf16.mxu0 %v270
  %510 = vmatmul.mubr.bf16.gmra.mrb[0].mxu0 %v269
  %v511 = vpop.f32.mrb[0].mxu0
  %v512 = vadd.f32 0.0, %v511
  %v513 = vpop.f32.mrb[0].mxu0
  %v514 = vpop.f32.mrb[0].mxu0
  %v515 = vadd.f32 0.0, %v514
  %v516 = vpop.f32.mrb[0].mxu0
  %517 = vmatprep.mubr.bf16.mxu0 %v272
  %518 = vmatmul.mubr.bf16.gmra.mrb[0].mxu0 %v271
  %v519 = vpop.f32.mrb[0].mxu0
  %v520 = vadd.f32 0.0, %v519
  %v521 = vpop.f32.mrb[0].mxu0
  %v522 = vpop.f32.mrb[0].mxu0
  %v523 = vadd.f32 0.0, %v522
  %v524 = vpop.f32.mrb[0].mxu0
  %525 = vmatprep.mubr.bf16.mxu0 %v274
  %526 = vmatmul.mubr.bf16.gmra.mrb[0].mxu0 %v273
  %v527 = vpop.f32.mrb[0].mxu0
  %v528 = vadd.f32 0.0, %v527
  %v529 = vpop.f32.mrb[0].mxu0
  %v530 = vpop.f32.mrb[0].mxu0
  %v531 = vadd.f32 0.0, %v530
  %v532 = vpop.f32.mrb[0].mxu0
  %533 = vmatprep.mubr.bf16.mxu0 %v276
  %534 = vmatmul.mubr.bf16.gmra.mrb[0].mxu0 %v275
  %v535 = vpop.f32.mrb[0].mxu0
  %v536 = vadd.f32 0.0, %v535
  %v537 = vpop.f32.mrb[0].mxu0
  %v538 = vpop.f32.mrb[0].mxu0
  %v539 = vadd.f32 0.0, %v538
  %v540 = vpop.f32.mrb[0].mxu0
  %541 = vmatprep.mubr.bf16.mxu0 %v278
  %542 = vmatmul.mubr.bf16.gmra.mrb[0].mxu0 %v277
  %v543 = vpop.f32.mrb[0].mxu0
  %v544 = vadd.f32 0.0, %v543
  %v545 = vpop.f32.mrb[0].mxu0
  %v546 = vpop.f32.mrb[0].mxu0
  %v547 = vadd.f32 0.0, %v546
  %v548 = vpop.f32.mrb[0].mxu0
  %549 = vmatprep.mubr.bf16.mxu0 %v280
  %550 = vmatmul.mubr.bf16.gmra.mrb[0].mxu0 %v279
  %v551 = vpop.f32.mrb[0].mxu0
  %v552 = vadd.f32 0.0, %v551
  %v553 = vpop.f32.mrb[0].mxu0
  %v554 = vpop.f32.mrb[0].mxu0
  %v555 = vadd.f32 0.0, %v554
  %v556 = vpop.f32.mrb[0].mxu0
  %557 = vmatprep.mubr.bf16.mxu0 %v282
  %558 = vmatmul.mubr.bf16.gmra.mrb[0].mxu0 %v281
  %v559 = vpop.f32.mrb[0].mxu0
  %v560 = vadd.f32 0.0, %v559
  %v561 = vpop.f32.mrb[0].mxu0
  %v562 = vpop.f32.mrb[0].mxu0
  %v563 = vadd.f32 0.0, %v562
  %v564 = vpop.f32.mrb[0].mxu0
  %565 = vmatprep.mubr.bf16.mxu0 %v284
  %566 = vmatmul.mubr.bf16.gmra.mrb[0].mxu0 %v283
  %v567 = vpop.f32.mrb[0].mxu0
  %v568 = vadd.f32 0.0, %v567
  %v569 = vpop.f32.mrb[0].mxu0
  %v570 = vpop.f32.mrb[0].mxu0
  %v571 = vadd.f32 0.0, %v570
  %v572 = vpop.f32.mrb[0].mxu0
  %573 = vdwg.mxu0
  %v574 = vadd.f32 %v93, %v448
  %v575 = vadd.f32 %v94, %v451
  %v576 = vadd.f32 %v95, %v456
  %v577 = vadd.f32 %v96, %v459
  %v578 = vadd.f32 %v97, %v464
  %v579 = vadd.f32 %v98, %v467
  %v580 = vadd.f32 %v99, %v472
  %v581 = vadd.f32 %v100, %v475
  %v582 = vadd.f32 %v101, %v480
  %v583 = vadd.f32 %v102, %v483
  %v584 = vadd.f32 %v103, %v488
  %v585 = vadd.f32 %v104, %v491
  %v586 = vadd.f32 %v105, %v496
  %v587 = vadd.f32 %v106, %v499
  %v588 = vadd.f32 %v107, %v504
  %v589 = vadd.f32 %v108, %v507
  %v590 = vadd.f32 %v109, %v512
  %v591 = vadd.f32 %v110, %v515
  %v592 = vadd.f32 %v111, %v520
  %v593 = vadd.f32 %v112, %v523
  %v594 = vadd.f32 %v113, %v528
  %v595 = vadd.f32 %v114, %v531
  %v596 = vadd.f32 %v115, %v536
  %v597 = vadd.f32 %v116, %v539
  %v598 = vadd.f32 %v117, %v544
  %v599 = vadd.f32 %v118, %v547
  %v600 = vadd.f32 %v119, %v552
  %v601 = vadd.f32 %v120, %v555
  %v602 = vadd.f32 %v121, %v560
  %v603 = vadd.f32 %v122, %v563
  %v604 = vadd.f32 %v123, %v568
  %v605 = vadd.f32 %v124, %v571
  %606 = vst [vmem:[#allocation2] sm:$0xff] %v574
  %607 = vst [vmem:[#allocation2 + $0x8] sm:$0xff] %v575
  %608 = vst [vmem:[#allocation2 + $0x10] sm:$0xff] %v576
  %609 = vst [vmem:[#allocation2 + $0x18] sm:$0xff] %v577
  %610 = vst [vmem:[#allocation2 + $0x20] sm:$0xff] %v578
  %611 = vst [vmem:[#allocation2 + $0x28] sm:$0xff] %v579
  %612 = vst [vmem:[#allocation2 + $0x30] sm:$0xff] %v580
  %613 = vst [vmem:[#allocation2 + $0x38] sm:$0xff] %v581
  %614 = vst [vmem:[#allocation2 + $0x40] sm:$0xff] %v582
  %615 = vst [vmem:[#allocation2 + $0x48] sm:$0xff] %v583
  %616 = vst [vmem:[#allocation2 + $0x50] sm:$0xff] %v584
  %617 = vst [vmem:[#allocation2 + $0x58] sm:$0xff] %v585
  %618 = vst [vmem:[#allocation2 + $0x60] sm:$0xff] %v586
  %619 = vst [vmem:[#allocation2 + $0x68] sm:$0xff] %v587
  %620 = vst [vmem:[#allocation2 + $0x70] sm:$0xff] %v588
  %621 = vst [vmem:[#allocation2 + $0x78] sm:$0xff] %v589
  %622 = vst [vmem:[#allocation2 + $0x80] sm:$0xff] %v590
  %623 = vst [vmem:[#allocation2 + $0x88] sm:$0xff] %v591
  %624 = vst [vmem:[#allocation2 + $0x90] sm:$0xff] %v592
  %625 = vst [vmem:[#allocation2 + $0x98] sm:$0xff] %v593
  %626 = vst [vmem:[#allocation2 + $0xa0] sm:$0xff] %v594
  %627 = vst [vmem:[#allocation2 + $0xa8] sm:$0xff] %v595
  %628 = vst [vmem:[#allocation2 + $0xb0] sm:$0xff] %v596
  %629 = vst [vmem:[#allocation2 + $0xb8] sm:$0xff] %v597
  %630 = vst [vmem:[#allocation2 + $0xc0] sm:$0xff] %v598
  %631 = vst [vmem:[#allocation2 + $0xc8] sm:$0xff] %v599
  %632 = vst [vmem:[#allocation2 + $0xd0] sm:$0xff] %v600
  %633 = vst [vmem:[#allocation2 + $0xd8] sm:$0xff] %v601
  %634 = vst [vmem:[#allocation2 + $0xe0] sm:$0xff] %v602
  %635 = vst [vmem:[#allocation2 + $0xe8] sm:$0xff] %v603
  %636 = vst [vmem:[#allocation2 + $0xf0] sm:$0xff] %v604
  %637 = vst [vmem:[#allocation2 + $0xf8] sm:$0xff] %v605
  // Predicated region
  $region22: #{gnn_forward.1} parent=0 // pred_check
    %p638 = pneg %p20
  $region23: #{gnn_forward.1} parent=0 // pred_check_branch
    %640 = sbr.rel (%p638) target = $region25
  $region24: #{gnn_forward.1} parent=0 // pred_region
    %v641 = vld [vmem:[#allocation2] sm:$0xff]
    %v642 = vld [vmem:[#allocation2 + $0x8] sm:$0xff]
    %v643 = vld [vmem:[#allocation2 + $0x10] sm:$0xff]
    %v644 = vld [vmem:[#allocation2 + $0x18] sm:$0xff]
    %v645 = vld [vmem:[#allocation2 + $0x20] sm:$0xff]
    %v646 = vld [vmem:[#allocation2 + $0x28] sm:$0xff]
    %v647 = vld [vmem:[#allocation2 + $0x30] sm:$0xff]
    %v648 = vld [vmem:[#allocation2 + $0x38] sm:$0xff]
    %v649 = vld [vmem:[#allocation2 + $0x40] sm:$0xff]
    %v650 = vld [vmem:[#allocation2 + $0x48] sm:$0xff]
    %v651 = vld [vmem:[#allocation2 + $0x50] sm:$0xff]
    %v652 = vld [vmem:[#allocation2 + $0x58] sm:$0xff]
    %v653 = vld [vmem:[#allocation2 + $0x60] sm:$0xff]
    %v654 = vld [vmem:[#allocation2 + $0x68] sm:$0xff]
    %v655 = vld [vmem:[#allocation2 + $0x70] sm:$0xff]
    %v656 = vld [vmem:[#allocation2 + $0x78] sm:$0xff]
    %v657 = vld [vmem:[#allocation2 + $0x80] sm:$0xff]
    %v658 = vld [vmem:[#allocation2 + $0x88] sm:$0xff]
    %v659 = vld [vmem:[#allocation2 + $0x90] sm:$0xff]
    %v660 = vld [vmem:[#allocation2 + $0x98] sm:$0xff]
    %v661 = vld [vmem:[#allocation2 + $0xa0] sm:$0xff]
    %v662 = vld [vmem:[#allocation2 + $0xa8] sm:$0xff]
    %v663 = vld [vmem:[#allocation2 + $0xb0] sm:$0xff]
    %v664 = vld [vmem:[#allocation2 + $0xb8] sm:$0xff]
    %v665 = vld [vmem:[#allocation2 + $0xc0] sm:$0xff]
    %v666 = vld [vmem:[#allocation2 + $0xc8] sm:$0xff]
    %v667 = vld [vmem:[#allocation2 + $0xd0] sm:$0xff]
    %v668 = vld [vmem:[#allocation2 + $0xd8] sm:$0xff]
    %v669 = vld [vmem:[#allocation2 + $0xe0] sm:$0xff]
    %v670 = vld [vmem:[#allocation2 + $0xe8] sm:$0xff]
    %v671 = vld [vmem:[#allocation2 + $0xf0] sm:$0xff]
    %v672 = vld [vmem:[#allocation2 + $0xf8] sm:$0xff]
    %v673 = vld [vmem:[%s2] sm:$0xff]
    %v674 = vld [vmem:[%s2 + $0x8] sm:$0xff]
    %v675 = vld [vmem:[%s2 + $0x10] sm:$0xff]
    %v676 = vld [vmem:[%s2 + $0x18] sm:$0xff]
    %v677 = vld [vmem:[%s2 + $0x20] sm:$0xff]
    %v678 = vld [vmem:[%s2 + $0x28] sm:$0xff]
    %v679 = vld [vmem:[%s2 + $0x30] sm:$0xff]
    %v680 = vld [vmem:[%s2 + $0x38] sm:$0xff]
    %v681 = vld [vmem:[%s2 + $0x40] sm:$0xff]
    %v682 = vld [vmem:[%s2 + $0x48] sm:$0xff]
    %v683 = vld [vmem:[%s2 + $0x50] sm:$0xff]
    %v684 = vld [vmem:[%s2 + $0x58] sm:$0xff]
    %v685 = vld [vmem:[%s2 + $0x60] sm:$0xff]
    %v686 = vld [vmem:[%s2 + $0x68] sm:$0xff]
    %v687 = vld [vmem:[%s2 + $0x70] sm:$0xff]
    %v688 = vld [vmem:[%s2 + $0x78] sm:$0xff]
    %v689 = vld [vmem:[%s2 + $0x80] sm:$0xff]
    %v690 = vld [vmem:[%s2 + $0x88] sm:$0xff]
    %v691 = vld [vmem:[%s2 + $0x90] sm:$0xff]
    %v692 = vld [vmem:[%s2 + $0x98] sm:$0xff]
    %v693 = vld [vmem:[%s2 + $0xa0] sm:$0xff]
    %v694 = vld [vmem:[%s2 + $0xa8] sm:$0xff]
    %v695 = vld [vmem:[%s2 + $0xb0] sm:$0xff]
    %v696 = vld [vmem:[%s2 + $0xb8] sm:$0xff]
    %v697 = vld [vmem:[%s2 + $0xc0] sm:$0xff]
    %v698 = vld [vmem:[%s2 + $0xc8] sm:$0xff]
    %v699 = vld [vmem:[%s2 + $0xd0] sm:$0xff]
    %v700 = vld [vmem:[%s2 + $0xd8] sm:$0xff]
    %v701 = vld [vmem:[%s2 + $0xe0] sm:$0xff]
    %v702 = vld [vmem:[%s2 + $0xe8] sm:$0xff]
    %v703 = vld [vmem:[%s2 + $0xf0] sm:$0xff]
    %v704 = vld [vmem:[%s2 + $0xf8] sm:$0xff]
    %706 = vset.pattern.permute.xlu0 0
    %707 = vperm.xlu0 %706, %v673
    %v708 = vpop.permute.xlu0 %707
    %711 = vset.pattern.permute.xlu0 0
    %712 = vperm.xlu0 %711, %v674
    %v713 = vpop.permute.xlu0 %712
    %716 = vset.pattern.permute.xlu0 0
    %717 = vperm.xlu0 %716, %v675
    %v718 = vpop.permute.xlu0 %717
    %721 = vset.pattern.permute.xlu0 0
    %722 = vperm.xlu0 %721, %v676
    %v723 = vpop.permute.xlu0 %722
    %726 = vset.pattern.permute.xlu0 0
    %727 = vperm.xlu0 %726, %v677
    %v728 = vpop.permute.xlu0 %727
    %731 = vset.pattern.permute.xlu0 0
    %732 = vperm.xlu0 %731, %v678
    %v733 = vpop.permute.xlu0 %732
    %736 = vset.pattern.permute.xlu0 0
    %737 = vperm.xlu0 %736, %v679
    %v738 = vpop.permute.xlu0 %737
    %741 = vset.pattern.permute.xlu0 0
    %742 = vperm.xlu0 %741, %v680
    %v743 = vpop.permute.xlu0 %742
    %746 = vset.pattern.permute.xlu0 0
    %747 = vperm.xlu0 %746, %v681
    %v748 = vpop.permute.xlu0 %747
    %751 = vset.pattern.permute.xlu0 0
    %752 = vperm.xlu0 %751, %v682
    %v753 = vpop.permute.xlu0 %752
    %756 = vset.pattern.permute.xlu0 0
    %757 = vperm.xlu0 %756, %v683
    %v758 = vpop.permute.xlu0 %757
    %761 = vset.pattern.permute.xlu0 0
    %762 = vperm.xlu0 %761, %v684
    %v763 = vpop.permute.xlu0 %762
    %766 = vset.pattern.permute.xlu0 0
    %767 = vperm.xlu0 %766, %v685
    %v768 = vpop.permute.xlu0 %767
    %771 = vset.pattern.permute.xlu0 0
    %772 = vperm.xlu0 %771, %v686
    %v773 = vpop.permute.xlu0 %772
    %776 = vset.pattern.permute.xlu0 0
    %777 = vperm.xlu0 %776, %v687
    %v778 = vpop.permute.xlu0 %777
    %781 = vset.pattern.permute.xlu0 0
    %782 = vperm.xlu0 %781, %v688
    %v783 = vpop.permute.xlu0 %782
    %786 = vset.pattern.permute.xlu0 0
    %787 = vperm.xlu0 %786, %v689
    %v788 = vpop.permute.xlu0 %787
    %791 = vset.pattern.permute.xlu0 0
    %792 = vperm.xlu0 %791, %v690
    %v793 = vpop.permute.xlu0 %792
    %796 = vset.pattern.permute.xlu0 0
    %797 = vperm.xlu0 %796, %v691
    %v798 = vpop.permute.xlu0 %797
    %801 = vset.pattern.permute.xlu0 0
    %802 = vperm.xlu0 %801, %v692
    %v803 = vpop.permute.xlu0 %802
    %806 = vset.pattern.permute.xlu0 0
    %807 = vperm.xlu0 %806, %v693
    %v808 = vpop.permute.xlu0 %807
    %811 = vset.pattern.permute.xlu0 0
    %812 = vperm.xlu0 %811, %v694
    %v813 = vpop.permute.xlu0 %812
    %816 = vset.pattern.permute.xlu0 0
    %817 = vperm.xlu0 %816, %v695
    %v818 = vpop.permute.xlu0 %817
    %821 = vset.pattern.permute.xlu0 0
    %822 = vperm.xlu0 %821, %v696
    %v823 = vpop.permute.xlu0 %822
    %826 = vset.pattern.permute.xlu0 0
    %827 = vperm.xlu0 %826, %v697
    %v828 = vpop.permute.xlu0 %827
    %831 = vset.pattern.permute.xlu0 0
    %832 = vperm.xlu0 %831, %v698
    %v833 = vpop.permute.xlu0 %832
    %836 = vset.pattern.permute.xlu0 0
    %837 = vperm.xlu0 %836, %v699
    %v838 = vpop.permute.xlu0 %837
    %841 = vset.pattern.permute.xlu0 0
    %842 = vperm.xlu0 %841, %v700
    %v843 = vpop.permute.xlu0 %842
    %846 = vset.pattern.permute.xlu0 0
    %847 = vperm.xlu0 %846, %v701
    %v848 = vpop.permute.xlu0 %847
    %851 = vset.pattern.permute.xlu0 0
    %852 = vperm.xlu0 %851, %v702
    %v853 = vpop.permute.xlu0 %852
    %856 = vset.pattern.permute.xlu0 0
    %857 = vperm.xlu0 %856, %v703
    %v858 = vpop.permute.xlu0 %857
    %861 = vset.pattern.permute.xlu0 0
    %862 = vperm.xlu0 %861, %v704
    %v863 = vpop.permute.xlu0 %862
    %v865 = vmul.f32 %v641, %v708
    %v866 = vmul.f32 %v642, %v713
    %v867 = vmul.f32 %v643, %v718
    %v868 = vmul.f32 %v644, %v723
    %v869 = vmul.f32 %v645, %v728
    %v870 = vmul.f32 %v646, %v733
    %v871 = vmul.f32 %v647, %v738
    %v872 = vmul.f32 %v648, %v743
    %v873 = vmul.f32 %v649, %v748
    %v874 = vmul.f32 %v650, %v753
    %v875 = vmul.f32 %v651, %v758
    %v876 = vmul.f32 %v652, %v763
    %v877 = vmul.f32 %v653, %v768
    %v878 = vmul.f32 %v654, %v773
    %v879 = vmul.f32 %v655, %v778
    %v880 = vmul.f32 %v656, %v783
    %v881 = vmul.f32 %v657, %v788
    %v882 = vmul.f32 %v658, %v793
    %v883 = vmul.f32 %v659, %v798
    %v884 = vmul.f32 %v660, %v803
    %v885 = vmul.f32 %v661, %v808
    %v886 = vmul.f32 %v662, %v813
    %v887 = vmul.f32 %v663, %v818
    %v888 = vmul.f32 %v664, %v823
    %v889 = vmul.f32 %v665, %v828
    %v890 = vmul.f32 %v666, %v833
    %v891 = vmul.f32 %v667, %v838
    %v892 = vmul.f32 %v668, %v843
    %v893 = vmul.f32 %v669, %v848
    %v894 = vmul.f32 %v670, %v853
    %v895 = vmul.f32 %v671, %v858
    %v896 = vmul.f32 %v672, %v863
    %v897 = vld [vmem:[%s3] sm:$0x1]
    %v899 = vlaneseq
    %v900 = vshrl.u32 %v899, 7
    %v901 = vsub.s32 0, %v900
    %v902 = vrot.slane %v897, %v901
    %v904 = vadd.f32 %v865, %v902
    %v905 = vadd.f32 %v866, %v902
    %v906 = vadd.f32 %v867, %v902
    %v907 = vadd.f32 %v868, %v902
    %v908 = vadd.f32 %v869, %v902
    %v909 = vadd.f32 %v870, %v902
    %v910 = vadd.f32 %v871, %v902
    %v911 = vadd.f32 %v872, %v902
    %v912 = vadd.f32 %v873, %v902
    %v913 = vadd.f32 %v874, %v902
    %v914 = vadd.f32 %v875, %v902
    %v915 = vadd.f32 %v876, %v902
    %v916 = vadd.f32 %v877, %v902
    %v917 = vadd.f32 %v878, %v902
    %v918 = vadd.f32 %v879, %v902
    %v919 = vadd.f32 %v880, %v902
    %v920 = vadd.f32 %v881, %v902
    %v921 = vadd.f32 %v882, %v902
    %v922 = vadd.f32 %v883, %v902
    %v923 = vadd.f32 %v884, %v902
    %v924 = vadd.f32 %v885, %v902
    %v925 = vadd.f32 %v886, %v902
    %v926 = vadd.f32 %v887, %v902
    %v927 = vadd.f32 %v888, %v902
    %v928 = vadd.f32 %v889, %v902
    %v929 = vadd.f32 %v890, %v902
    %v930 = vadd.f32 %v891, %v902
    %v931 = vadd.f32 %v892, %v902
    %v932 = vadd.f32 %v893, %v902
    %v933 = vadd.f32 %v894, %v902
    %v934 = vadd.f32 %v895, %v902
    %v935 = vadd.f32 %v896, %v902
    %936 = vst [vmem:[%s4] sm:$0xff] %v904
    %937 = vst [vmem:[%s4 + $0x8] sm:$0xff] %v905
    %938 = vst [vmem:[%s4 + $0x10] sm:$0xff] %v906
    %939 = vst [vmem:[%s4 + $0x18] sm:$0xff] %v907
    %940 = vst [vmem:[%s4 + $0x20] sm:$0xff] %v908
    %941 = vst [vmem:[%s4 + $0x28] sm:$0xff] %v909
    %942 = vst [vmem:[%s4 + $0x30] sm:$0xff] %v910
    %943 = vst [vmem:[%s4 + $0x38] sm:$0xff] %v911
    %944 = vst [vmem:[%s4 + $0x40] sm:$0xff] %v912
    %945 = vst [vmem:[%s4 + $0x48] sm:$0xff] %v913
    %946 = vst [vmem:[%s4 + $0x50] sm:$0xff] %v914
    %947 = vst [vmem:[%s4 + $0x58] sm:$0xff] %v915
    %948 = vst [vmem:[%s4 + $0x60] sm:$0xff] %v916
    %949 = vst [vmem:[%s4 + $0x68] sm:$0xff] %v917
    %950 = vst [vmem:[%s4 + $0x70] sm:$0xff] %v918
    %951 = vst [vmem:[%s4 + $0x78] sm:$0xff] %v919
    %952 = vst [vmem:[%s4 + $0x80] sm:$0xff] %v920
    %953 = vst [vmem:[%s4 + $0x88] sm:$0xff] %v921
    %954 = vst [vmem:[%s4 + $0x90] sm:$0xff] %v922
    %955 = vst [vmem:[%s4 + $0x98] sm:$0xff] %v923
    %956 = vst [vmem:[%s4 + $0xa0] sm:$0xff] %v924
    %957 = vst [vmem:[%s4 + $0xa8] sm:$0xff] %v925
    %958 = vst [vmem:[%s4 + $0xb0] sm:$0xff] %v926
    %959 = vst [vmem:[%s4 + $0xb8] sm:$0xff] %v927
    %960 = vst [vmem:[%s4 + $0xc0] sm:$0xff] %v928
    %961 = vst [vmem:[%s4 + $0xc8] sm:$0xff] %v929
    %962 = vst [vmem:[%s4 + $0xd0] sm:$0xff] %v930
    %963 = vst [vmem:[%s4 + $0xd8] sm:$0xff] %v931
    %964 = vst [vmem:[%s4 + $0xe0] sm:$0xff] %v932
    %965 = vst [vmem:[%s4 + $0xe8] sm:$0xff] %v933
    %966 = vst [vmem:[%s4 + $0xf0] sm:$0xff] %v934
    %967 = vst [vmem:[%s4 + $0xf8] sm:$0xff] %v935
    %v968 = vlaneseq
    %v969 = vand.u32 %v968, 127
    %vm970 = vcmp.lt.s32.totalorder %v969, 32
    %v971 = vsel %vm970, %v904, -inf
    %v972 = vsel %vm970, %v905, -inf
    %v973 = vsel %vm970, %v906, -inf
    %v974 = vsel %vm970, %v907, -inf
    %v975 = vsel %vm970, %v908, -inf
    %v976 = vsel %vm970, %v909, -inf
    %v977 = vsel %vm970, %v910, -inf
    %v978 = vsel %vm970, %v911, -inf
    %v979 = vsel %vm970, %v912, -inf
    %v980 = vsel %vm970, %v913, -inf
    %v981 = vsel %vm970, %v914, -inf
    %v982 = vsel %vm970, %v915, -inf
    %v983 = vsel %vm970, %v916, -inf
    %v984 = vsel %vm970, %v917, -inf
    %v985 = vsel %vm970, %v918, -inf
    %v986 = vsel %vm970, %v919, -inf
    %v987 = vsel %vm970, %v920, -inf
    %v988 = vsel %vm970, %v921, -inf
    %v989 = vsel %vm970, %v922, -inf
    %v990 = vsel %vm970, %v923, -inf
    %v991 = vsel %vm970, %v924, -inf
    %v992 = vsel %vm970, %v925, -inf
    %v993 = vsel %vm970, %v926, -inf
    %v994 = vsel %vm970, %v927, -inf
    %v995 = vsel %vm970, %v928, -inf
    %v996 = vsel %vm970, %v929, -inf
    %v997 = vsel %vm970, %v930, -inf
    %v998 = vsel %vm970, %v931, -inf
    %v999 = vsel %vm970, %v932, -inf
    %v1000 = vsel %vm970, %v933, -inf
    %v1001 = vsel %vm970, %v934, -inf
    %v1002 = vsel %vm970, %v935, -inf
    %1003 = vmax.xlane.f32.xlu0 %v971
    %v1004 = vpop.xlane.xlu0 %1003
    %1005 = vmax.xlane.f32.xlu0 %v972
    %v1006 = vpop.xlane.xlu0 %1005
    %1007 = vmax.xlane.f32.xlu0 %v973
    %v1008 = vpop.xlane.xlu0 %1007
    %1009 = vmax.xlane.f32.xlu0 %v974
    %v1010 = vpop.xlane.xlu0 %1009
    %1011 = vmax.xlane.f32.xlu0 %v975
    %v1012 = vpop.xlane.xlu0 %1011
    %1013 = vmax.xlane.f32.xlu0 %v976
    %v1014 = vpop.xlane.xlu0 %1013
    %1015 = vmax.xlane.f32.xlu0 %v977
    %v1016 = vpop.xlane.xlu0 %1015
    %1017 = vmax.xlane.f32.xlu0 %v978
    %v1018 = vpop.xlane.xlu0 %1017
    %1019 = vmax.xlane.f32.xlu0 %v979
    %v1020 = vpop.xlane.xlu0 %1019
    %1021 = vmax.xlane.f32.xlu0 %v980
    %v1022 = vpop.xlane.xlu0 %1021
    %1023 = vmax.xlane.f32.xlu0 %v981
    %v1024 = vpop.xlane.xlu0 %1023
    %1025 = vmax.xlane.f32.xlu0 %v982
    %v1026 = vpop.xlane.xlu0 %1025
    %1027 = vmax.xlane.f32.xlu0 %v983
    %v1028 = vpop.xlane.xlu0 %1027
    %1029 = vmax.xlane.f32.xlu0 %v984
    %v1030 = vpop.xlane.xlu0 %1029
    %1031 = vmax.xlane.f32.xlu0 %v985
    %v1032 = vpop.xlane.xlu0 %1031
    %1033 = vmax.xlane.f32.xlu0 %v986
    %v1034 = vpop.xlane.xlu0 %1033
    %1035 = vmax.xlane.f32.xlu0 %v987
    %v1036 = vpop.xlane.xlu0 %1035
    %1037 = vmax.xlane.f32.xlu0 %v988
    %v1038 = vpop.xlane.xlu0 %1037
    %1039 = vmax.xlane.f32.xlu0 %v989
    %v1040 = vpop.xlane.xlu0 %1039
    %1041 = vmax.xlane.f32.xlu0 %v990
    %v1042 = vpop.xlane.xlu0 %1041
    %1043 = vmax.xlane.f32.xlu0 %v991
    %v1044 = vpop.xlane.xlu0 %1043
    %1045 = vmax.xlane.f32.xlu0 %v992
    %v1046 = vpop.xlane.xlu0 %1045
    %1047 = vmax.xlane.f32.xlu0 %v993
    %v1048 = vpop.xlane.xlu0 %1047
    %1049 = vmax.xlane.f32.xlu0 %v994
    %v1050 = vpop.xlane.xlu0 %1049
    %1051 = vmax.xlane.f32.xlu0 %v995
    %v1052 = vpop.xlane.xlu0 %1051
    %1053 = vmax.xlane.f32.xlu0 %v996
    %v1054 = vpop.xlane.xlu0 %1053
    %1055 = vmax.xlane.f32.xlu0 %v997
    %v1056 = vpop.xlane.xlu0 %1055
    %1057 = vmax.xlane.f32.xlu0 %v998
    %v1058 = vpop.xlane.xlu0 %1057
    %1059 = vmax.xlane.f32.xlu0 %v999
    %v1060 = vpop.xlane.xlu0 %1059
    %1061 = vmax.xlane.f32.xlu0 %v1000
    %v1062 = vpop.xlane.xlu0 %1061
    %1063 = vmax.xlane.f32.xlu0 %v1001
    %v1064 = vpop.xlane.xlu0 %1063
    %1065 = vmax.xlane.f32.xlu0 %v1002
    %v1066 = vpop.xlane.xlu0 %1065
    %v1067 = vsub.f32 %v971, %v1004
    %v1068 = vsub.f32 %v972, %v1006
    %v1069 = vsub.f32 %v973, %v1008
    %v1070 = vsub.f32 %v974, %v1010
    %v1071 = vsub.f32 %v975, %v1012
    %v1072 = vsub.f32 %v976, %v1014
    %v1073 = vsub.f32 %v977, %v1016
    %v1074 = vsub.f32 %v978, %v1018
    %v1075 = vsub.f32 %v979, %v1020
    %v1076 = vsub.f32 %v980, %v1022
    %v1077 = vsub.f32 %v981, %v1024
    %v1078 = vsub.f32 %v982, %v1026
    %v1079 = vsub.f32 %v983, %v1028
    %v1080 = vsub.f32 %v984, %v1030
    %v1081 = vsub.f32 %v985, %v1032
    %v1082 = vsub.f32 %v986, %v1034
    %v1083 = vsub.f32 %v987, %v1036
    %v1084 = vsub.f32 %v988, %v1038
    %v1085 = vsub.f32 %v989, %v1040
    %v1086 = vsub.f32 %v990, %v1042
    %v1087 = vsub.f32 %v991, %v1044
    %v1088 = vsub.f32 %v992, %v1046
    %v1089 = vsub.f32 %v993, %v1048
    %v1090 = vsub.f32 %v994, %v1050
    %v1091 = vsub.f32 %v995, %v1052
    %v1092 = vsub.f32 %v996, %v1054
    %v1093 = vsub.f32 %v997, %v1056
    %v1094 = vsub.f32 %v998, %v1058
    %v1095 = vsub.f32 %v999, %v1060
    %v1096 = vsub.f32 %v1000, %v1062
    %v1097 = vsub.f32 %v1001, %v1064
    %v1098 = vsub.f32 %v1002, %v1066
    %v1099 = vmul.f32 %v1067, 1.442695
    %v1100 = vpow.pop %v1099
    %v1101 = vmul.f32 %v1068, 1.442695
    %v1102 = vpow.pop %v1101
    %v1103 = vmul.f32 %v1069, 1.442695
    %v1104 = vpow.pop %v1103
    %v1105 = vmul.f32 %v1070, 1.442695
    %v1106 = vpow.pop %v1105
    %v1107 = vmul.f32 %v1071, 1.442695
    %v1108 = vpow.pop %v1107
    %v1109 = vmul.f32 %v1072, 1.442695
    %v1110 = vpow.pop %v1109
    %v1111 = vmul.f32 %v1073, 1.442695
    %v1112 = vpow.pop %v1111
    %v1113 = vmul.f32 %v1074, 1.442695
    %v1114 = vpow.pop %v1113
    %v1115 = vmul.f32 %v1075, 1.442695
    %v1116 = vpow.pop %v1115
    %v1117 = vmul.f32 %v1076, 1.442695
    %v1118 = vpow.pop %v1117
    %v1119 = vmul.f32 %v1077, 1.442695
    %v1120 = vpow.pop %v1119
    %v1121 = vmul.f32 %v1078, 1.442695
    %v1122 = vpow.pop %v1121
    %v1123 = vmul.f32 %v1079, 1.442695
    %v1124 = vpow.pop %v1123
    %v1125 = vmul.f32 %v1080, 1.442695
    %v1126 = vpow.pop %v1125
    %v1127 = vmul.f32 %v1081, 1.442695
    %v1128 = vpow.pop %v1127
    %v1129 = vmul.f32 %v1082, 1.442695
    %v1130 = vpow.pop %v1129
    %v1131 = vmul.f32 %v1083, 1.442695
    %v1132 = vpow.pop %v1131
    %v1133 = vmul.f32 %v1084, 1.442695
    %v1134 = vpow.pop %v1133
    %v1135 = vmul.f32 %v1085, 1.442695
    %v1136 = vpow.pop %v1135
    %v1137 = vmul.f32 %v1086, 1.442695
    %v1138 = vpow.pop %v1137
    %v1139 = vmul.f32 %v1087, 1.442695
    %v1140 = vpow.pop %v1139
    %v1141 = vmul.f32 %v1088, 1.442695
    %v1142 = vpow.pop %v1141
    %v1143 = vmul.f32 %v1089, 1.442695
    %v1144 = vpow.pop %v1143
    %v1145 = vmul.f32 %v1090, 1.442695
    %v1146 = vpow.pop %v1145
    %v1147 = vmul.f32 %v1091, 1.442695
    %v1148 = vpow.pop %v1147
    %v1149 = vmul.f32 %v1092, 1.442695
    %v1150 = vpow.pop %v1149
    %v1151 = vmul.f32 %v1093, 1.442695
    %v1152 = vpow.pop %v1151
    %v1153 = vmul.f32 %v1094, 1.442695
    %v1154 = vpow.pop %v1153
    %v1155 = vmul.f32 %v1095, 1.442695
    %v1156 = vpow.pop %v1155
    %v1157 = vmul.f32 %v1096, 1.442695
    %v1158 = vpow.pop %v1157
    %v1159 = vmul.f32 %v1097, 1.442695
    %v1160 = vpow.pop %v1159
    %v1161 = vmul.f32 %v1098, 1.442695
    %v1162 = vpow.pop %v1161
    %1163 = vadd.xlane.f32.xlu0 %v1100
    %v1164 = vpop.xlane.xlu0 %1163
    %1165 = vadd.xlane.f32.xlu0 %v1102
    %v1166 = vpop.xlane.xlu0 %1165
    %1167 = vadd.xlane.f32.xlu0 %v1104
    %v1168 = vpop.xlane.xlu0 %1167
    %1169 = vadd.xlane.f32.xlu0 %v1106
    %v1170 = vpop.xlane.xlu0 %1169
    %1171 = vadd.xlane.f32.xlu0 %v1108
    %v1172 = vpop.xlane.xlu0 %1171
    %1173 = vadd.xlane.f32.xlu0 %v1110
    %v1174 = vpop.xlane.xlu0 %1173
    %1175 = vadd.xlane.f32.xlu0 %v1112
    %v1176 = vpop.xlane.xlu0 %1175
    %1177 = vadd.xlane.f32.xlu0 %v1114
    %v1178 = vpop.xlane.xlu0 %1177
    %1179 = vadd.xlane.f32.xlu0 %v1116
    %v1180 = vpop.xlane.xlu0 %1179
    %1181 = vadd.xlane.f32.xlu0 %v1118
    %v1182 = vpop.xlane.xlu0 %1181
    %1183 = vadd.xlane.f32.xlu0 %v1120
    %v1184 = vpop.xlane.xlu0 %1183
    %1185 = vadd.xlane.f32.xlu0 %v1122
    %v1186 = vpop.xlane.xlu0 %1185
    %1187 = vadd.xlane.f32.xlu0 %v1124
    %v1188 = vpop.xlane.xlu0 %1187
    %1189 = vadd.xlane.f32.xlu0 %v1126
    %v1190 = vpop.xlane.xlu0 %1189
    %1191 = vadd.xlane.f32.xlu0 %v1128
    %v1192 = vpop.xlane.xlu0 %1191
    %1193 = vadd.xlane.f32.xlu0 %v1130
    %v1194 = vpop.xlane.xlu0 %1193
    %1195 = vadd.xlane.f32.xlu0 %v1132
    %v1196 = vpop.xlane.xlu0 %1195
    %1197 = vadd.xlane.f32.xlu0 %v1134
    %v1198 = vpop.xlane.xlu0 %1197
    %1199 = vadd.xlane.f32.xlu0 %v1136
    %v1200 = vpop.xlane.xlu0 %1199
    %1201 = vadd.xlane.f32.xlu0 %v1138
    %v1202 = vpop.xlane.xlu0 %1201
    %1203 = vadd.xlane.f32.xlu0 %v1140
    %v1204 = vpop.xlane.xlu0 %1203
    %1205 = vadd.xlane.f32.xlu0 %v1142
    %v1206 = vpop.xlane.xlu0 %1205
    %1207 = vadd.xlane.f32.xlu0 %v1144
    %v1208 = vpop.xlane.xlu0 %1207
    %1209 = vadd.xlane.f32.xlu0 %v1146
    %v1210 = vpop.xlane.xlu0 %1209
    %1211 = vadd.xlane.f32.xlu0 %v1148
    %v1212 = vpop.xlane.xlu0 %1211
    %1213 = vadd.xlane.f32.xlu0 %v1150
    %v1214 = vpop.xlane.xlu0 %1213
    %1215 = vadd.xlane.f32.xlu0 %v1152
    %v1216 = vpop.xlane.xlu0 %1215
    %1217 = vadd.xlane.f32.xlu0 %v1154
    %v1218 = vpop.xlane.xlu0 %1217
    %1219 = vadd.xlane.f32.xlu0 %v1156
    %v1220 = vpop.xlane.xlu0 %1219
    %1221 = vadd.xlane.f32.xlu0 %v1158
    %v1222 = vpop.xlane.xlu0 %1221
    %1223 = vadd.xlane.f32.xlu0 %v1160
    %v1224 = vpop.xlane.xlu0 %1223
    %1225 = vadd.xlane.f32.xlu0 %v1162
    %v1226 = vpop.xlane.xlu0 %1225
    %v1227 = vlog2.pop %v1164
    %v1228 = vmul.f32 %v1227, 0.6931472
    %v1229 = vlog2.pop %v1166
    %v1230 = vmul.f32 %v1229, 0.6931472
    %v1231 = vlog2.pop %v1168
    %v1232 = vmul.f32 %v1231, 0.6931472
    %v1233 = vlog2.pop %v1170
    %v1234 = vmul.f32 %v1233, 0.6931472
    %v1235 = vlog2.pop %v1172
    %v1236 = vmul.f32 %v1235, 0.6931472
    %v1237 = vlog2.pop %v1174
    %v1238 = vmul.f32 %v1237, 0.6931472
    %v1239 = vlog2.pop %v1176
    %v1240 = vmul.f32 %v1239, 0.6931472
    %v1241 = vlog2.pop %v1178
    %v1242 = vmul.f32 %v1241, 0.6931472
    %v1243 = vlog2.pop %v1180
    %v1244 = vmul.f32 %v1243, 0.6931472
    %v1245 = vlog2.pop %v1182
    %v1246 = vmul.f32 %v1245, 0.6931472
    %v1247 = vlog2.pop %v1184
    %v1248 = vmul.f32 %v1247, 0.6931472
    %v1249 = vlog2.pop %v1186
    %v1250 = vmul.f32 %v1249, 0.6931472
    %v1251 = vlog2.pop %v1188
    %v1252 = vmul.f32 %v1251, 0.6931472
    %v1253 = vlog2.pop %v1190
    %v1254 = vmul.f32 %v1253, 0.6931472
    %v1255 = vlog2.pop %v1192
    %v1256 = vmul.f32 %v1255, 0.6931472
    %v1257 = vlog2.pop %v1194
    %v1258 = vmul.f32 %v1257, 0.6931472
    %v1259 = vlog2.pop %v1196
    %v1260 = vmul.f32 %v1259, 0.6931472
    %v1261 = vlog2.pop %v1198
    %v1262 = vmul.f32 %v1261, 0.6931472
    %v1263 = vlog2.pop %v1200
    %v1264 = vmul.f32 %v1263, 0.6931472
    %v1265 = vlog2.pop %v1202
    %v1266 = vmul.f32 %v1265, 0.6931472
    %v1267 = vlog2.pop %v1204
    %v1268 = vmul.f32 %v1267, 0.6931472
    %v1269 = vlog2.pop %v1206
    %v1270 = vmul.f32 %v1269, 0.6931472
    %v1271 = vlog2.pop %v1208
    %v1272 = vmul.f32 %v1271, 0.6931472
    %v1273 = vlog2.pop %v1210
    %v1274 = vmul.f32 %v1273, 0.6931472
    %v1275 = vlog2.pop %v1212
    %v1276 = vmul.f32 %v1275, 0.6931472
    %v1277 = vlog2.pop %v1214
    %v1278 = vmul.f32 %v1277, 0.6931472
    %v1279 = vlog2.pop %v1216
    %v1280 = vmul.f32 %v1279, 0.6931472
    %v1281 = vlog2.pop %v1218
    %v1282 = vmul.f32 %v1281, 0.6931472
    %v1283 = vlog2.pop %v1220
    %v1284 = vmul.f32 %v1283, 0.6931472
    %v1285 = vlog2.pop %v1222
    %v1286 = vmul.f32 %v1285, 0.6931472
    %v1287 = vlog2.pop %v1224
    %v1288 = vmul.f32 %v1287, 0.6931472
    %v1289 = vlog2.pop %v1226
    %v1290 = vmul.f32 %v1289, 0.6931472
    %v1291 = vsub.f32 %v1067, %v1228
    %v1292 = vsub.f32 %v1068, %v1230
    %v1293 = vsub.f32 %v1069, %v1232
    %v1294 = vsub.f32 %v1070, %v1234
    %v1295 = vsub.f32 %v1071, %v1236
    %v1296 = vsub.f32 %v1072, %v1238
    %v1297 = vsub.f32 %v1073, %v1240
    %v1298 = vsub.f32 %v1074, %v1242
    %v1299 = vsub.f32 %v1075, %v1244
    %v1300 = vsub.f32 %v1076, %v1246
    %v1301 = vsub.f32 %v1077, %v1248
    %v1302 = vsub.f32 %v1078, %v1250
    %v1303 = vsub.f32 %v1079, %v1252
    %v1304 = vsub.f32 %v1080, %v1254
    %v1305 = vsub.f32 %v1081, %v1256
    %v1306 = vsub.f32 %v1082, %v1258
    %v1307 = vsub.f32 %v1083, %v1260
    %v1308 = vsub.f32 %v1084, %v1262
    %v1309 = vsub.f32 %v1085, %v1264
    %v1310 = vsub.f32 %v1086, %v1266
    %v1311 = vsub.f32 %v1087, %v1268
    %v1312 = vsub.f32 %v1088, %v1270
    %v1313 = vsub.f32 %v1089, %v1272
    %v1314 = vsub.f32 %v1090, %v1274
    %v1315 = vsub.f32 %v1091, %v1276
    %v1316 = vsub.f32 %v1092, %v1278
    %v1317 = vsub.f32 %v1093, %v1280
    %v1318 = vsub.f32 %v1094, %v1282
    %v1319 = vsub.f32 %v1095, %v1284
    %v1320 = vsub.f32 %v1096, %v1286
    %v1321 = vsub.f32 %v1097, %v1288
    %v1322 = vsub.f32 %v1098, %v1290
    %1323 = vst [vmem:[%s5] sm:$0xff] %v1291
    %1324 = vst [vmem:[%s5 + $0x8] sm:$0xff] %v1292
    %1325 = vst [vmem:[%s5 + $0x10] sm:$0xff] %v1293
    %1326 = vst [vmem:[%s5 + $0x18] sm:$0xff] %v1294
    %1327 = vst [vmem:[%s5 + $0x20] sm:$0xff] %v1295
    %1328 = vst [vmem:[%s5 + $0x28] sm:$0xff] %v1296
    %1329 = vst [vmem:[%s5 + $0x30] sm:$0xff] %v1297
    %1330 = vst [vmem:[%s5 + $0x38] sm:$0xff] %v1298
    %1331 = vst [vmem:[%s5 + $0x40] sm:$0xff] %v1299
    %1332 = vst [vmem:[%s5 + $0x48] sm:$0xff] %v1300
    %1333 = vst [vmem:[%s5 + $0x50] sm:$0xff] %v1301
    %1334 = vst [vmem:[%s5 + $0x58] sm:$0xff] %v1302
    %1335 = vst [vmem:[%s5 + $0x60] sm:$0xff] %v1303
    %1336 = vst [vmem:[%s5 + $0x68] sm:$0xff] %v1304
    %1337 = vst [vmem:[%s5 + $0x70] sm:$0xff] %v1305
    %1338 = vst [vmem:[%s5 + $0x78] sm:$0xff] %v1306
    %1339 = vst [vmem:[%s5 + $0x80] sm:$0xff] %v1307
    %1340 = vst [vmem:[%s5 + $0x88] sm:$0xff] %v1308
    %1341 = vst [vmem:[%s5 + $0x90] sm:$0xff] %v1309
    %1342 = vst [vmem:[%s5 + $0x98] sm:$0xff] %v1310
    %1343 = vst [vmem:[%s5 + $0xa0] sm:$0xff] %v1311
    %1344 = vst [vmem:[%s5 + $0xa8] sm:$0xff] %v1312
    %1345 = vst [vmem:[%s5 + $0xb0] sm:$0xff] %v1313
    %1346 = vst [vmem:[%s5 + $0xb8] sm:$0xff] %v1314
    %1347 = vst [vmem:[%s5 + $0xc0] sm:$0xff] %v1315
    %1348 = vst [vmem:[%s5 + $0xc8] sm:$0xff] %v1316
    %1349 = vst [vmem:[%s5 + $0xd0] sm:$0xff] %v1317
    %1350 = vst [vmem:[%s5 + $0xd8] sm:$0xff] %v1318
    %1351 = vst [vmem:[%s5 + $0xe0] sm:$0xff] %v1319
    %1352 = vst [vmem:[%s5 + $0xe8] sm:$0xff] %v1320
    %1353 = vst [vmem:[%s5 + $0xf0] sm:$0xff] %v1321
    %1354 = vst [vmem:[%s5 + $0xf8] sm:$0xff] %v1322
  $region25: #{gnn_forward.1} parent=0 // pred_fallthru
    _
  // Predicated region
  $region26: #{gnn_forward.1} parent=0 // pred_check
    _
  $region27: #{gnn_forward.1} parent=0 // pred_check_branch
    %1356 = sbr.rel (0) target = $region29
  $region28: #{gnn_forward.1} parent=0 // pred_region
    _
  $region29: #{gnn_forward.1} parent=0 // pred_fallthru
    _
  // Predicated region
  $region30: #{gnn_forward.1} parent=0 // pred_check
    _
  $region31: #{gnn_forward.1} parent=0 // pred_check_branch
    %1358 = sbr.rel (0) target = $region33
  $region32: #{gnn_forward.1} parent=0 // pred_region
    _
  $region33: #{gnn_forward.1} parent=0 // pred_fallthru
    _
  // Predicated region
  $region34: #{gnn_forward.1} parent=0 // pred_check
    _
  $region35: #{gnn_forward.1} parent=0 // pred_check_branch
    %1360 = sbr.rel (0) target = $region37
  $region36: #{gnn_forward.1} parent=0 // pred_region
    _
  $region37: #{gnn_forward.1} parent=0 // pred_fallthru
    _
  // Predicated region
  $region38: #{gnn_forward.1} parent=0 // pred_check
    _
  $region39: #{gnn_forward.1} parent=0 // pred_check_branch
    %1362 = sbr.rel (0) target = $region41
  $region40: #{gnn_forward.1} parent=0 // pred_region
    _
  $region41: #{gnn_forward.1} parent=0 // pred_fallthru
    _

</llo_original>
